<compile_context>
chip_gen: v7x
topology: tpu7x:2x2x1
jax: 0.10.0
libtpu: 0.0.40
codegen_flags: <defaults>
</compile_context>

<pallas_src>
import functools

import jax
import jax.numpy as jnp
from jax.experimental import pallas as pl
from jax.experimental.pallas import tpu as pltpu

INPUT_SIZE = 11
HIDDEN_SIZE = 256
OUTPUT_SIZE = 4
DEFAULT_TILE_B = 8192            # batch rows per grid step


def _round_up(x, m):
    return ((x + m - 1) // m) * m


def snakenet_kernel(x_ref, w1_ref, b1_ref, w2_ref, b2_ref, o_ref):
    # x_ref : (TILE_B, 11)   f32
    # w1_ref: (11, 256)      f32  (resident)
    # b1_ref: (1, 256)       f32  (resident)
    # w2_ref: (256, 4)       f32  (resident)
    # b2_ref: (1, 4)         f32  (resident)
    # o_ref : (TILE_B, 4)    f32
    h = jnp.dot(x_ref[...], w1_ref[...], preferred_element_type=jnp.float32)
    h = jnp.maximum(h + b1_ref[...], 0.0)                     # bias + ReLU in f32
    out = jnp.dot(h, w2_ref[...], preferred_element_type=jnp.float32)
    o_ref[...] = (out + b2_ref[...]).astype(o_ref.dtype)


def snakenet_forward(x, w1, b1, w2, b2, *, tile_b=DEFAULT_TILE_B):
    """relu(x @ w1 + b1) @ w2 + b2.  x: (B, 11) f32 -> (B, 4) f32."""
    B = x.shape[0]
    # Keep >=2 grid steps when B is moderate (v7x megacore), tiles multiple of 128.
    tile_b = max(128, min(tile_b, _round_up(pl.cdiv(B, 2), 128)))
    grid = (pl.cdiv(B, tile_b),)

    b1_r = b1.reshape(1, HIDDEN_SIZE).astype(jnp.float32)
    b2_r = b2.reshape(1, OUTPUT_SIZE).astype(jnp.float32)

    flops = 2 * B * (INPUT_SIZE * HIDDEN_SIZE + HIDDEN_SIZE * OUTPUT_SIZE)
    bytes_accessed = (B * (INPUT_SIZE + OUTPUT_SIZE) * 4
                      + (INPUT_SIZE * HIDDEN_SIZE + HIDDEN_SIZE
                         + HIDDEN_SIZE * OUTPUT_SIZE + OUTPUT_SIZE) * 4)

    out = pl.pallas_call(
        snakenet_kernel,
        out_shape=jax.ShapeDtypeStruct((B, OUTPUT_SIZE), jnp.float32),
        grid_spec=pltpu.PrefetchScalarGridSpec(
            num_scalar_prefetch=0,
            grid=grid,
            in_specs=[
                pl.BlockSpec((tile_b, INPUT_SIZE), lambda i: (i, 0)),        # x tile
                pl.BlockSpec((INPUT_SIZE, HIDDEN_SIZE), lambda i: (0, 0)),   # w1 (resident)
                pl.BlockSpec((1, HIDDEN_SIZE), lambda i: (0, 0)),            # b1 (resident)
                pl.BlockSpec((HIDDEN_SIZE, OUTPUT_SIZE), lambda i: (0, 0)),  # w2 (resident)
                pl.BlockSpec((1, OUTPUT_SIZE), lambda i: (0, 0)),            # b2 (resident)
            ],
            out_specs=pl.BlockSpec((tile_b, OUTPUT_SIZE), lambda i: (i, 0)),
        ),
        compiler_params=pltpu.CompilerParams(
            dimension_semantics=("parallel",),   # v7x: shard batch tiles over 2 TCs
        ),
        cost_estimate=pl.CostEstimate(
            flops=flops, transcendentals=0, bytes_accessed=bytes_accessed),
    )(x.astype(jnp.float32), w1.astype(jnp.float32), b1_r,
      w2.astype(jnp.float32), b2_r)
    return out


def init_params(key):
    """nn.Linear-style init: U(-1/sqrt(fan_in), 1/sqrt(fan_in)); weights stored (in, out)."""
    k1, k2, k3, k4 = jax.random.split(key, 4)
    bound1 = 1.0 / jnp.sqrt(float(INPUT_SIZE))
    bound2 = 1.0 / jnp.sqrt(float(HIDDEN_SIZE))
    w1 = jax.random.uniform(k1, (INPUT_SIZE, HIDDEN_SIZE), jnp.float32, -bound1, bound1)
    b1 = jax.random.uniform(k2, (HIDDEN_SIZE,), jnp.float32, -bound1, bound1)
    w2 = jax.random.uniform(k3, (HIDDEN_SIZE, OUTPUT_SIZE), jnp.float32, -bound2, bound2)
    b2 = jax.random.uniform(k4, (OUTPUT_SIZE,), jnp.float32, -bound2, bound2)
    return w1, b1, w2, b2


def _reference(x, w1, b1, w2, b2):
    """Pure-JAX f32 reference mirroring the kernel math."""
    h = jnp.maximum(jnp.dot(x, w1) + b1, 0.0)
    return jnp.dot(h, w2) + b2


if __name__ == "__main__":
    key = jax.random.PRNGKey(0)
    pkey, xkey = jax.random.split(key)
    w1, b1, w2, b2 = init_params(pkey)

    fwd = jax.jit(functools.partial(snakenet_forward, tile_b=DEFAULT_TILE_B))

    # Small-batch check (single tile).
    batch = 8
    x = jax.random.normal(xkey, (batch, INPUT_SIZE), jnp.float32)
    out = jax.block_until_ready(fwd(x, w1, b1, w2, b2))
    ref = _reference(x, w1, b1, w2, b2)
    assert out.shape == (batch, OUTPUT_SIZE)
    assert jnp.allclose(out, ref, atol=1e-4, rtol=1e-4), \
        float(jnp.max(jnp.abs(out - ref)))

    # Multi-tile check: exercises the batch grid, including a partial last tile.
    x2 = jax.random.normal(jax.random.fold_in(xkey, 1), (300, INPUT_SIZE), jnp.float32)
    out2 = jax.block_until_ready(snakenet_forward(x2, w1, b1, w2, b2, tile_b=128))
    ref2 = _reference(x2, w1, b1, w2, b2)
    assert out2.shape == (300, OUTPUT_SIZE)
    assert jnp.allclose(out2, ref2, atol=1e-4, rtol=1e-4), \
        float(jnp.max(jnp.abs(out2 - ref2)))

    print("KERNEL_OK")
</pallas_src>

<mosaic_0001>
module attributes {stable_mosaic.version = 11 : i64} {
  func.func @snakenet_kernel(%arg0: i32, %arg1: memref<128x11xf32, #tpu.memory_space<vmem>>, %arg2: memref<11x256xf32, #tpu.memory_space<vmem>>, %arg3: memref<1x256xf32, #tpu.memory_space<vmem>>, %arg4: memref<256x4xf32, #tpu.memory_space<vmem>>, %arg5: memref<1x4xf32, #tpu.memory_space<vmem>>, %arg6: memref<128x4xf32, #tpu.memory_space<vmem>>) attributes {dimension_semantics = [#tpu.dimension_semantics<parallel>], iteration_bounds = array<i64: 1>, scalar_prefetch = 0 : i64, scratch_operands = 0 : i64, tpu.core_type = #tpu.core_type<tc>, window_params = [{transform_indices = @transform_0, window_bounds = array<i64: 128, 11>}, {pipeline_mode = #tpu.pipeline_mode<synchronous>, transform_indices = @transform_1, window_bounds = array<i64: 11, 256>}, {pipeline_mode = #tpu.pipeline_mode<synchronous>, transform_indices = @transform_2, window_bounds = array<i64: 1, 256>}, {pipeline_mode = #tpu.pipeline_mode<synchronous>, transform_indices = @transform_3, window_bounds = array<i64: 256, 4>}, {pipeline_mode = #tpu.pipeline_mode<synchronous>, transform_indices = @transform_4, window_bounds = array<i64: 1, 4>}, {transform_indices = @transform_5, window_bounds = array<i64: 128, 4>}]} {
    %c0 = arith.constant 0 : index
    %c0_0 = arith.constant 0 : index
    %0 = vector.load %arg1[%c0, %c0_0] : memref<128x11xf32, #tpu.memory_space<vmem>>, vector<128x11xf32>
    %c0_1 = arith.constant 0 : index
    %c0_2 = arith.constant 0 : index
    %1 = vector.load %arg2[%c0_1, %c0_2] : memref<11x256xf32, #tpu.memory_space<vmem>>, vector<11x256xf32>
    %cst = arith.constant dense<0.000000e+00> : vector<128x256xf32>
    %2 = tpu.matmul %0, %1, %cst {dimension_numbers = #tpu.dot_dimension_numbers<[1], [0], [0], [1], [0, 0, 1, 1], [], []>} : vector<128x11xf32>, vector<11x256xf32>, vector<128x256xf32> -> vector<128x256xf32>
    %c0_3 = arith.constant 0 : index
    %c0_4 = arith.constant 0 : index
    %3 = vector.load %arg3[%c0_3, %c0_4] : memref<1x256xf32, #tpu.memory_space<vmem>>, vector<1x256xf32>
    %4 = vector.broadcast %3 : vector<1x256xf32> to vector<128x256xf32>
    %5 = arith.addf %2, %4 : vector<128x256xf32>
    %cst_5 = arith.constant 0.000000e+00 : f32
    %6 = vector.broadcast %cst_5 : f32 to vector<128x256xf32>
    %7 = arith.maximumf %5, %6 : vector<128x256xf32>
    %c0_6 = arith.constant 0 : index
    %c0_7 = arith.constant 0 : index
    %8 = vector.load %arg4[%c0_6, %c0_7] : memref<256x4xf32, #tpu.memory_space<vmem>>, vector<256x4xf32>
    %cst_8 = arith.constant dense<0.000000e+00> : vector<128x4xf32>
    %9 = tpu.matmul %7, %8, %cst_8 {dimension_numbers = #tpu.dot_dimension_numbers<[1], [0], [0], [1], [0, 0, 1, 1], [], []>} : vector<128x256xf32>, vector<256x4xf32>, vector<128x4xf32> -> vector<128x4xf32>
    %c0_9 = arith.constant 0 : index
    %c0_10 = arith.constant 0 : index
    %10 = vector.load %arg5[%c0_9, %c0_10] : memref<1x4xf32, #tpu.memory_space<vmem>>, vector<1x4xf32>
    %11 = vector.broadcast %10 : vector<1x4xf32> to vector<128x4xf32>
    %12 = arith.addf %9, %11 : vector<128x4xf32>
    %c0_11 = arith.constant 0 : index
    %c0_12 = arith.constant 0 : index
    %13 = vector.load %arg6[%c0_11, %c0_12] : memref<128x4xf32, #tpu.memory_space<vmem>>, vector<128x4xf32>
    tpu.vector_store %arg6[%c0_11, %c0_12], %12 {strides = array<i32>} : memref<128x4xf32, #tpu.memory_space<vmem>>, vector<128x4xf32>,
    return
  }
  func.func @transform_0(%arg0: i32) -> (i32, i32) {
    %c0_i32 = arith.constant 0 : i32
    %c0_i32_0 = arith.constant 0 : i32
    return %arg0, %c0_i32 : i32, i32
  }
  func.func @transform_1(%arg0: i32) -> (i32, i32) {
    %c0_i32 = arith.constant 0 : i32
    %c0_i32_0 = arith.constant 0 : i32
    %c0_i32_1 = arith.constant 0 : i32
    return %c0_i32, %c0_i32_0 : i32, i32
  }
  func.func @transform_2(%arg0: i32) -> (i32, i32) {
    %c0_i32 = arith.constant 0 : i32
    %c0_i32_0 = arith.constant 0 : i32
    %c0_i32_1 = arith.constant 0 : i32
    return %c0_i32, %c0_i32_0 : i32, i32
  }
  func.func @transform_3(%arg0: i32) -> (i32, i32) {
    %c0_i32 = arith.constant 0 : i32
    %c0_i32_0 = arith.constant 0 : i32
    %c0_i32_1 = arith.constant 0 : i32
    return %c0_i32, %c0_i32_0 : i32, i32
  }
  func.func @transform_4(%arg0: i32) -> (i32, i32) {
    %c0_i32 = arith.constant 0 : i32
    %c0_i32_0 = arith.constant 0 : i32
    %c0_i32_1 = arith.constant 0 : i32
    return %c0_i32, %c0_i32_0 : i32, i32
  }
  func.func @transform_5(%arg0: i32) -> (i32, i32) {
    %c0_i32 = arith.constant 0 : i32
    %c0_i32_0 = arith.constant 0 : i32
    return %arg0, %c0_i32 : i32, i32
  }
}

</mosaic_0001>

<llo_original>
// kernel: snakenet_forward.1
$region0: #{snakenet_forward.1}
  #allocation0 [shape = 'u32[]', space=smem, size = 0x4, offset = 0x4, fixed_abs, tag = 'smem constant byte address 0x4 - core index']
  #allocation1 [shape = 'u32[144,128]{1,0:T(1,128)}', space=vmem, size = 0x12000, scoped, tag = 'internal scratch']
  %s0 = inlined_call_operand.vmem [shape: f32[8,11], index: 0, kind: input, shape index: {}]
  %s1 = inlined_call_operand.vmem [shape: f32[11,256], index: 1, kind: input, shape index: {}]
  %s2 = inlined_call_operand.vmem [shape: f32[1,256], index: 2, kind: input, shape index: {}]
  %s3 = inlined_call_operand.vmem [shape: f32[256,4], index: 3, kind: input, shape index: {}]
  %s4 = inlined_call_operand.vmem [shape: f32[1,4], index: 4, kind: input, shape index: {}]
  %s5 = inlined_call_operand.vmem [shape: f32[8,4], index: 5, kind: output, shape index: {}]
  %s6 = sld [smem:[#allocation0]]
  $region64: #{snakenet_forward.1} parent=0
    _
  %s8 = ssub.s32 1, %s6
  %s9 = scalar_select 0, %s8, %s6
  $region1: #{snakenet_forward.1} parent=0
    #allocation2 [shape = 'u8[65536]{0}', space=vmem, size = 0x10000, scoped, tag = 'output window, operand 0, single buffered']
    // Predicated region
    $region2: #{snakenet_forward.1} parent=1 // pred_check
      _
    $region3: #{snakenet_forward.1} parent=1 // pred_check_branch
      %11 = sbr.rel (0) target = $region5
    $region4: #{snakenet_forward.1} parent=1 // pred_region
      _
    $region5: #{snakenet_forward.1} parent=1 // pred_fallthru
      _
    // Predicated region
    $region6: #{snakenet_forward.1} parent=1 // pred_check
      _
    $region7: #{snakenet_forward.1} parent=1 // pred_check_branch
      %13 = sbr.rel (0) target = $region9
    $region8: #{snakenet_forward.1} parent=1 // pred_region
      _
    $region9: #{snakenet_forward.1} parent=1 // pred_fallthru
      _
    // Predicated region
    $region10: #{snakenet_forward.1} parent=1 // pred_check
      _
    $region11: #{snakenet_forward.1} parent=1 // pred_check_branch
      %15 = sbr.rel (0) target = $region13
    $region12: #{snakenet_forward.1} parent=1 // pred_region
      _
    $region13: #{snakenet_forward.1} parent=1 // pred_fallthru
      _
    // Predicated region
    $region14: #{snakenet_forward.1} parent=1 // pred_check
      _
    $region15: #{snakenet_forward.1} parent=1 // pred_check_branch
      %17 = sbr.rel (0) target = $region17
    $region16: #{snakenet_forward.1} parent=1 // pred_region
      _
    $region17: #{snakenet_forward.1} parent=1 // pred_fallthru
      _
    // Predicated region
    $region18: #{snakenet_forward.1} parent=1 // pred_check
      _
    $region19: #{snakenet_forward.1} parent=1 // pred_check_branch
      %19 = sbr.rel (0) target = $region21
    $region20: #{snakenet_forward.1} parent=1 // pred_region
      _
    $region21: #{snakenet_forward.1} parent=1 // pred_fallthru
      _
    %v20 = vld [vmem:[%s0] sm:$0xff]
    %v21 = vld [vmem:[%s0 + $0x8] sm:$0xff]
    %v22 = vld [vmem:[%s0 + $0x10] sm:$0xff]
    %v23 = vld [vmem:[%s0 + $0x18] sm:$0xff]
    %v24 = vld [vmem:[%s0 + $0x20] sm:$0xff]
    %v25 = vld [vmem:[%s0 + $0x28] sm:$0xff]
    %v26 = vld [vmem:[%s0 + $0x30] sm:$0xff]
    %v27 = vld [vmem:[%s0 + $0x38] sm:$0xff]
    %v28 = vld [vmem:[%s0 + $0x40] sm:$0xff]
    %v29 = vld [vmem:[%s0 + $0x48] sm:$0xff]
    %v30 = vld [vmem:[%s0 + $0x50] sm:$0xff]
    %v31 = vld [vmem:[%s0 + $0x58] sm:$0xff]
    %v32 = vld [vmem:[%s0 + $0x60] sm:$0xff]
    %v33 = vld [vmem:[%s0 + $0x68] sm:$0xff]
    %v34 = vld [vmem:[%s0 + $0x70] sm:$0xff]
    %v35 = vld [vmem:[%s0 + $0x78] sm:$0xff]
    %v36 = vld [vmem:[%s1] sm:$0xff]
    %v37 = vld [vmem:[%s1 + $0x8] sm:$0xff]
    %v38 = vld [vmem:[%s1 + $0x10] sm:$0x7]
    %v39 = vld [vmem:[%s1 + $0x18] sm:$0x7]
    %v40 = vld [vmem:[%s2] sm:$0x3]
    %v42 = vlaneseq
    %v43 = vshrl.u32 %v42, 7
    %v44 = vsub.s32 0, %v43
    %v45 = vrot.slane %v40, %v44
    %v46 = vlaneseq
    %v47 = vshrl.u32 %v46, 7
    %v48 = vsub.s32 1, %v47
    %v49 = vrot.slane %v40, %v48
    %vm52 = vcmask 89088
    %v54 = vsel %vm52, %v20, 0
    %v57 = vsel %vm52, %v21, 0
    %v60 = vsel %vm52, %v22, 0
    %v63 = vsel %vm52, %v23, 0
    %v66 = vsel %vm52, %v24, 0
    %v69 = vsel %vm52, %v25, 0
    %v72 = vsel %vm52, %v26, 0
    %v75 = vsel %vm52, %v27, 0
    %v78 = vsel %vm52, %v28, 0
    %v81 = vsel %vm52, %v29, 0
    %v84 = vsel %vm52, %v30, 0
    %v87 = vsel %vm52, %v31, 0
    %v90 = vsel %vm52, %v32, 0
    %v93 = vsel %vm52, %v33, 0
    %v96 = vsel %vm52, %v34, 0
    %v99 = vsel %vm52, %v35, 0
    %vm101 = vcmask 1042432
    %v103 = vsel %vm101, %v38, 0
    %v106 = vsel %vm101, %v39, 0
    %108 = vmatprep.subr.mxu0 %v37
    %109 = vmatpush1.msra.mxu0 %v36
    %110 = vmatprep.subr.mxu0 %v106
    %111 = vmatpush1.msra.mxu0 %v103
    %112 = vmatprep.subr.mxu0 0.0
    %113 = vmatpush1.msra.mxu0 0.0
    %114 = vmatprep.subr.mxu0 0.0
    %115 = vmatpush1.msra.mxu0 0.0
    %116 = vmatprep.subr.mxu0 0.0
    %117 = vmatpush1.msra.mxu0 0.0
    %118 = vmatprep.subr.mxu0 0.0
    %119 = vmatpush1.msra.mxu0 0.0
    %120 = vmatprep.subr.mxu0 0.0
    %121 = vmatpush1.msra.mxu0 0.0
    %122 = vmatprep.subr.mxu0 0.0
    %123 = vmatpush1.msra.mxu0 0.0
    %124 = vmatprep.subr.mxu0 0.0
    %125 = vmatpush1.msra.mxu0 0.0
    %126 = vmatprep.subr.mxu0 0.0
    %127 = vmatpush1.msra.mxu0 0.0
    %128 = vmatprep.subr.mxu0 0.0
    %129 = vmatpush1.msra.mxu0 0.0
    %130 = vmatprep.subr.mxu0 0.0
    %131 = vmatpush1.msra.mxu0 0.0
    %132 = vmatprep.subr.mxu0 0.0
    %133 = vmatpush1.msra.mxu0 0.0
    %134 = vmatprep.subr.mxu0 0.0
    %135 = vmatpush1.msra.mxu0 0.0
    %136 = vmatprep.subr.mxu0 0.0
    %137 = vmatpush1.msra.mxu0 0.0
    %138 = vmatprep.subr.mxu0 0.0
    %139 = vmatpush1.msra.mxu0 0.0
    %140 = vmatprep.subr.mxu0 0.0
    %141 = vmatpush1.msra.mxu0 0.0
    %142 = vmatprep.subr.mxu0 0.0
    %143 = vmatpush1.msra.mxu0 0.0
    %144 = vmatprep.subr.mxu0 0.0
    %145 = vmatpush1.msra.mxu0 0.0
    %146 = vmatprep.subr.mxu0 0.0
    %147 = vmatpush1.msra.mxu0 0.0
    %148 = vmatprep.subr.mxu0 0.0
    %149 = vmatpush1.msra.mxu0 0.0
    %150 = vmatprep.subr.mxu0 0.0
    %151 = vmatpush1.msra.mxu0 0.0
    %152 = vmatprep.subr.mxu0 0.0
    %153 = vmatpush1.msra.mxu0 0.0
    %154 = vmatprep.subr.mxu0 0.0
    %155 = vmatpush1.msra.mxu0 0.0
    %156 = vmatprep.subr.mxu0 0.0
    %157 = vmatpush1.msra.mxu0 0.0
    %158 = vmatprep.subr.mxu0 0.0
    %159 = vmatpush1.msra.mxu0 0.0
    %160 = vmatprep.subr.mxu0 0.0
    %161 = vmatpush1.msra.mxu0 0.0
    %162 = vmatprep.subr.mxu0 0.0
    %163 = vmatpush1.msra.mxu0 0.0
    %164 = vmatprep.subr.mxu0 0.0
    %165 = vmatpush1.msra.mxu0 0.0
    %166 = vmatprep.subr.mxu0 0.0
    %167 = vmatpush1.msra.mxu0 0.0
    %168 = vmatprep.subr.mxu0 0.0
    %169 = vmatpush1.msra.mxu0 0.0
    %170 = vmatprep.subr.mxu0 0.0
    %171 = vmatpush1.msra.mxu0 0.0
    %172 = vmatprep.mubr.f32.mxu0 0.0
    %173 = vmatmul.mubr.f32.gmra.mrb[0].mxu0 %v54
    %v174 = vpop.f32.mrb[0].mxu0
    %v175 = vadd.f32 %v45, %v174
    %v176 = vpop.f32.mrb[0].mxu0
    %v177 = vadd.f32 %v49, %v176
    %178 = vmatprep.mubr.f32.mxu0 0.0
    %179 = vmatmul.mubr.f32.gmra.mrb[0].mxu0 %v57
    %v180 = vpop.f32.mrb[0].mxu0
    %v181 = vadd.f32 %v45, %v180
    %v182 = vpop.f32.mrb[0].mxu0
    %v183 = vadd.f32 %v49, %v182
    %184 = vmatprep.mubr.f32.mxu0 0.0
    %185 = vmatmul.mubr.f32.gmra.mrb[0].mxu0 %v60
    %v186 = vpop.f32.mrb[0].mxu0
    %v187 = vadd.f32 %v45, %v186
    %v188 = vpop.f32.mrb[0].mxu0
    %v189 = vadd.f32 %v49, %v188
    %190 = vmatprep.mubr.f32.mxu0 0.0
    %191 = vmatmul.mubr.f32.gmra.mrb[0].mxu0 %v63
    %v192 = vpop.f32.mrb[0].mxu0
    %v193 = vadd.f32 %v45, %v192
    %v194 = vpop.f32.mrb[0].mxu0
    %v195 = vadd.f32 %v49, %v194
    %196 = vmatprep.mubr.f32.mxu0 0.0
    %197 = vmatmul.mubr.f32.gmra.mrb[0].mxu0 %v66
    %v198 = vpop.f32.mrb[0].mxu0
    %v199 = vadd.f32 %v45, %v198
    %v200 = vpop.f32.mrb[0].mxu0
    %v201 = vadd.f32 %v49, %v200
    %202 = vmatprep.mubr.f32.mxu0 0.0
    %203 = vmatmul.mubr.f32.gmra.mrb[0].mxu0 %v69
    %v204 = vpop.f32.mrb[0].mxu0
    %v205 = vadd.f32 %v45, %v204
    %v206 = vpop.f32.mrb[0].mxu0
    %v207 = vadd.f32 %v49, %v206
    %208 = vmatprep.mubr.f32.mxu0 0.0
    %209 = vmatmul.mubr.f32.gmra.mrb[0].mxu0 %v72
    %v210 = vpop.f32.mrb[0].mxu0
    %v211 = vadd.f32 %v45, %v210
    %v212 = vpop.f32.mrb[0].mxu0
    %v213 = vadd.f32 %v49, %v212
    %214 = vmatprep.mubr.f32.mxu0 0.0
    %215 = vmatmul.mubr.f32.gmra.mrb[0].mxu0 %v75
    %v216 = vpop.f32.mrb[0].mxu0
    %v217 = vadd.f32 %v45, %v216
    %v218 = vpop.f32.mrb[0].mxu0
    %v219 = vadd.f32 %v49, %v218
    %220 = vmatprep.mubr.f32.mxu0 0.0
    %221 = vmatmul.mubr.f32.gmra.mrb[0].mxu0 %v78
    %v222 = vpop.f32.mrb[0].mxu0
    %v223 = vadd.f32 %v45, %v222
    %v224 = vpop.f32.mrb[0].mxu0
    %v225 = vadd.f32 %v49, %v224
    %226 = vmatprep.mubr.f32.mxu0 0.0
    %227 = vmatmul.mubr.f32.gmra.mrb[0].mxu0 %v81
    %v228 = vpop.f32.mrb[0].mxu0
    %v229 = vadd.f32 %v45, %v228
    %v230 = vpop.f32.mrb[0].mxu0
    %v231 = vadd.f32 %v49, %v230
    %232 = vmatprep.mubr.f32.mxu0 0.0
    %233 = vmatmul.mubr.f32.gmra.mrb[0].mxu0 %v84
    %v234 = vpop.f32.mrb[0].mxu0
    %v235 = vadd.f32 %v45, %v234
    %v236 = vpop.f32.mrb[0].mxu0
    %v237 = vadd.f32 %v49, %v236
    %238 = vmatprep.mubr.f32.mxu0 0.0
    %239 = vmatmul.mubr.f32.gmra.mrb[0].mxu0 %v87
    %v240 = vpop.f32.mrb[0].mxu0
    %v241 = vadd.f32 %v45, %v240
    %v242 = vpop.f32.mrb[0].mxu0
    %v243 = vadd.f32 %v49, %v242
    %244 = vmatprep.mubr.f32.mxu0 0.0
    %245 = vmatmul.mubr.f32.gmra.mrb[0].mxu0 %v90
    %v246 = vpop.f32.mrb[0].mxu0
    %v247 = vadd.f32 %v45, %v246
    %v248 = vpop.f32.mrb[0].mxu0
    %v249 = vadd.f32 %v49, %v248
    %250 = vmatprep.mubr.f32.mxu0 0.0
    %251 = vmatmul.mubr.f32.gmra.mrb[0].mxu0 %v93
    %v252 = vpop.f32.mrb[0].mxu0
    %v253 = vadd.f32 %v45, %v252
    %v254 = vpop.f32.mrb[0].mxu0
    %v255 = vadd.f32 %v49, %v254
    %256 = vmatprep.mubr.f32.mxu0 0.0
    %257 = vmatmul.mubr.f32.gmra.mrb[0].mxu0 %v96
    %v258 = vpop.f32.mrb[0].mxu0
    %v259 = vadd.f32 %v45, %v258
    %v260 = vpop.f32.mrb[0].mxu0
    %v261 = vadd.f32 %v49, %v260
    %262 = vmatprep.mubr.f32.mxu0 0.0
    %263 = vmatmul.mubr.f32.gmra.mrb[0].mxu0 %v99
    %v264 = vpop.f32.mrb[0].mxu0
    %v265 = vadd.f32 %v45, %v264
    %v266 = vpop.f32.mrb[0].mxu0
    %v267 = vadd.f32 %v49, %v266
    %268 = vdwg.mxu0
    %v269 = vmax.f32 %v175, 0.0
    %v270 = vmax.f32 %v177, 0.0
    %v271 = vmax.f32 %v181, 0.0
    %v272 = vmax.f32 %v183, 0.0
    %v273 = vmax.f32 %v187, 0.0
    %v274 = vmax.f32 %v189, 0.0
    %v275 = vmax.f32 %v193, 0.0
    %v276 = vmax.f32 %v195, 0.0
    %v277 = vmax.f32 %v199, 0.0
    %v278 = vmax.f32 %v201, 0.0
    %v279 = vmax.f32 %v205, 0.0
    %v280 = vmax.f32 %v207, 0.0
    %v281 = vmax.f32 %v211, 0.0
    %v282 = vmax.f32 %v213, 0.0
    %v283 = vmax.f32 %v217, 0.0
    %v284 = vmax.f32 %v219, 0.0
    %v285 = vmax.f32 %v223, 0.0
    %v286 = vmax.f32 %v225, 0.0
    %v287 = vmax.f32 %v229, 0.0
    %v288 = vmax.f32 %v231, 0.0
    %v289 = vmax.f32 %v235, 0.0
    %v290 = vmax.f32 %v237, 0.0
    %v291 = vmax.f32 %v241, 0.0
    %v292 = vmax.f32 %v243, 0.0
    %v293 = vmax.f32 %v247, 0.0
    %v294 = vmax.f32 %v249, 0.0
    %v295 = vmax.f32 %v253, 0.0
    %v296 = vmax.f32 %v255, 0.0
    %v297 = vmax.f32 %v259, 0.0
    %v298 = vmax.f32 %v261, 0.0
    %v299 = vmax.f32 %v265, 0.0
    %v300 = vmax.f32 %v267, 0.0
    %v301 = vld [vmem:[%s3] sm:$0xff]
    %v302 = vld [vmem:[%s3 + $0x8] sm:$0xff]
    %v303 = vld [vmem:[%s3 + $0x10] sm:$0xff]
    %v304 = vld [vmem:[%s3 + $0x18] sm:$0xff]
    %v305 = vld [vmem:[%s3 + $0x20] sm:$0xff]
    %v306 = vld [vmem:[%s3 + $0x28] sm:$0xff]
    %v307 = vld [vmem:[%s3 + $0x30] sm:$0xff]
    %v308 = vld [vmem:[%s3 + $0x38] sm:$0xff]
    %v309 = vld [vmem:[%s3 + $0x40] sm:$0xff]
    %v310 = vld [vmem:[%s3 + $0x48] sm:$0xff]
    %v311 = vld [vmem:[%s3 + $0x50] sm:$0xff]
    %v312 = vld [vmem:[%s3 + $0x58] sm:$0xff]
    %v313 = vld [vmem:[%s3 + $0x60] sm:$0xff]
    %v314 = vld [vmem:[%s3 + $0x68] sm:$0xff]
    %v315 = vld [vmem:[%s3 + $0x70] sm:$0xff]
    %v316 = vld [vmem:[%s3 + $0x78] sm:$0xff]
    %v317 = vld [vmem:[%s3 + $0x80] sm:$0xff]
    %v318 = vld [vmem:[%s3 + $0x88] sm:$0xff]
    %v319 = vld [vmem:[%s3 + $0x90] sm:$0xff]
    %v320 = vld [vmem:[%s3 + $0x98] sm:$0xff]
    %v321 = vld [vmem:[%s3 + $0xa0] sm:$0xff]
    %v322 = vld [vmem:[%s3 + $0xa8] sm:$0xff]
    %v323 = vld [vmem:[%s3 + $0xb0] sm:$0xff]
    %v324 = vld [vmem:[%s3 + $0xb8] sm:$0xff]
    %v325 = vld [vmem:[%s3 + $0xc0] sm:$0xff]
    %v326 = vld [vmem:[%s3 + $0xc8] sm:$0xff]
    %v327 = vld [vmem:[%s3 + $0xd0] sm:$0xff]
    %v328 = vld [vmem:[%s3 + $0xd8] sm:$0xff]
    %v329 = vld [vmem:[%s3 + $0xe0] sm:$0xff]
    %v330 = vld [vmem:[%s3 + $0xe8] sm:$0xff]
    %v331 = vld [vmem:[%s3 + $0xf0] sm:$0xff]
    %v332 = vld [vmem:[%s3 + $0xf8] sm:$0xff]
    %v333 = vld [vmem:[%s4] sm:$0x1]
    %v335 = vlaneseq
    %v336 = vshrl.u32 %v335, 7
    %v337 = vsub.s32 0, %v336
    %v338 = vrot.slane %v333, %v337
    %340 = vmatprep.subr.mxu0 0.0
    %341 = vmatpush1.msra.mxu0 %v301
    %342 = vmatprep.subr.mxu0 0.0
    %343 = vmatpush1.msra.mxu0 %v302
    %344 = vmatprep.subr.mxu0 0.0
    %345 = vmatpush1.msra.mxu0 %v303
    %346 = vmatprep.subr.mxu0 0.0
    %347 = vmatpush1.msra.mxu0 %v304
    %348 = vmatprep.subr.mxu0 0.0
    %349 = vmatpush1.msra.mxu0 %v305
    %350 = vmatprep.subr.mxu0 0.0
    %351 = vmatpush1.msra.mxu0 %v306
    %352 = vmatprep.subr.mxu0 0.0
    %353 = vmatpush1.msra.mxu0 %v307
    %354 = vmatprep.subr.mxu0 0.0
    %355 = vmatpush1.msra.mxu0 %v308
    %356 = vmatprep.subr.mxu0 0.0
    %357 = vmatpush1.msra.mxu0 %v309
    %358 = vmatprep.subr.mxu0 0.0
    %359 = vmatpush1.msra.mxu0 %v310
    %360 = vmatprep.subr.mxu0 0.0
    %361 = vmatpush1.msra.mxu0 %v311
    %362 = vmatprep.subr.mxu0 0.0
    %363 = vmatpush1.msra.mxu0 %v312
    %364 = vmatprep.subr.mxu0 0.0
    %365 = vmatpush1.msra.mxu0 %v313
    %366 = vmatprep.subr.mxu0 0.0
    %367 = vmatpush1.msra.mxu0 %v314
    %368 = vmatprep.subr.mxu0 0.0
    %369 = vmatpush1.msra.mxu0 %v315
    %370 = vmatprep.subr.mxu0 0.0
    %371 = vmatpush1.msra.mxu0 %v316
    %372 = vmatprep.subr.mxu0 0.0
    %373 = vmatpush1.msra.mxu0 %v317
    %374 = vmatprep.subr.mxu0 0.0
    %375 = vmatpush1.msra.mxu0 %v318
    %376 = vmatprep.subr.mxu0 0.0
    %377 = vmatpush1.msra.mxu0 %v319
    %378 = vmatprep.subr.mxu0 0.0
    %379 = vmatpush1.msra.mxu0 %v320
    %380 = vmatprep.subr.mxu0 0.0
    %381 = vmatpush1.msra.mxu0 %v321
    %382 = vmatprep.subr.mxu0 0.0
    %383 = vmatpush1.msra.mxu0 %v322
    %384 = vmatprep.subr.mxu0 0.0
    %385 = vmatpush1.msra.mxu0 %v323
    %386 = vmatprep.subr.mxu0 0.0
    %387 = vmatpush1.msra.mxu0 %v324
    %388 = vmatprep.subr.mxu0 0.0
    %389 = vmatpush1.msra.mxu0 %v325
    %390 = vmatprep.subr.mxu0 0.0
    %391 = vmatpush1.msra.mxu0 %v326
    %392 = vmatprep.subr.mxu0 0.0
    %393 = vmatpush1.msra.mxu0 %v327
    %394 = vmatprep.subr.mxu0 0.0
    %395 = vmatpush1.msra.mxu0 %v328
    %396 = vmatprep.subr.mxu0 0.0
    %397 = vmatpush1.msra.mxu0 %v329
    %398 = vmatprep.subr.mxu0 0.0
    %399 = vmatpush1.msra.mxu0 %v330
    %400 = vmatprep.subr.mxu0 0.0
    %401 = vmatpush1.msra.mxu0 %v331
    %402 = vmatprep.subr.mxu0 0.0
    %403 = vmatpush1.msra.mxu0 %v332
    %404 = vmatprep.mubr.f32.mxu0 %v270
    %405 = vmatmul.mubr.f32.gmra.mrb[0].mxu0 %v269
    %v406 = vpop.f32.mrb[0].mxu0
    %v407 = vadd.f32 %v338, %v406
    %v408 = vpop.f32.mrb[0].mxu0
    %409 = vmatprep.mubr.f32.mxu0 %v272
    %410 = vmatmul.mubr.f32.gmra.mrb[0].mxu0 %v271
    %v411 = vpop.f32.mrb[0].mxu0
    %v412 = vadd.f32 %v338, %v411
    %v413 = vpop.f32.mrb[0].mxu0
    %414 = vmatprep.mubr.f32.mxu0 %v274
    %415 = vmatmul.mubr.f32.gmra.mrb[0].mxu0 %v273
    %v416 = vpop.f32.mrb[0].mxu0
    %v417 = vadd.f32 %v338, %v416
    %v418 = vpop.f32.mrb[0].mxu0
    %419 = vmatprep.mubr.f32.mxu0 %v276
    %420 = vmatmul.mubr.f32.gmra.mrb[0].mxu0 %v275
    %v421 = vpop.f32.mrb[0].mxu0
    %v422 = vadd.f32 %v338, %v421
    %v423 = vpop.f32.mrb[0].mxu0
    %424 = vmatprep.mubr.f32.mxu0 %v278
    %425 = vmatmul.mubr.f32.gmra.mrb[0].mxu0 %v277
    %v426 = vpop.f32.mrb[0].mxu0
    %v427 = vadd.f32 %v338, %v426
    %v428 = vpop.f32.mrb[0].mxu0
    %429 = vmatprep.mubr.f32.mxu0 %v280
    %430 = vmatmul.mubr.f32.gmra.mrb[0].mxu0 %v279
    %v431 = vpop.f32.mrb[0].mxu0
    %v432 = vadd.f32 %v338, %v431
    %v433 = vpop.f32.mrb[0].mxu0
    %434 = vmatprep.mubr.f32.mxu0 %v282
    %435 = vmatmul.mubr.f32.gmra.mrb[0].mxu0 %v281
    %v436 = vpop.f32.mrb[0].mxu0
    %v437 = vadd.f32 %v338, %v436
    %v438 = vpop.f32.mrb[0].mxu0
    %439 = vmatprep.mubr.f32.mxu0 %v284
    %440 = vmatmul.mubr.f32.gmra.mrb[0].mxu0 %v283
    %v441 = vpop.f32.mrb[0].mxu0
    %v442 = vadd.f32 %v338, %v441
    %v443 = vpop.f32.mrb[0].mxu0
    %444 = vmatprep.mubr.f32.mxu0 %v286
    %445 = vmatmul.mubr.f32.gmra.mrb[0].mxu0 %v285
    %v446 = vpop.f32.mrb[0].mxu0
    %v447 = vadd.f32 %v338, %v446
    %v448 = vpop.f32.mrb[0].mxu0
    %449 = vmatprep.mubr.f32.mxu0 %v288
    %450 = vmatmul.mubr.f32.gmra.mrb[0].mxu0 %v287
    %v451 = vpop.f32.mrb[0].mxu0
    %v452 = vadd.f32 %v338, %v451
    %v453 = vpop.f32.mrb[0].mxu0
    %454 = vmatprep.mubr.f32.mxu0 %v290
    %455 = vmatmul.mubr.f32.gmra.mrb[0].mxu0 %v289
    %v456 = vpop.f32.mrb[0].mxu0
    %v457 = vadd.f32 %v338, %v456
    %v458 = vpop.f32.mrb[0].mxu0
    %459 = vmatprep.mubr.f32.mxu0 %v292
    %460 = vmatmul.mubr.f32.gmra.mrb[0].mxu0 %v291
    %v461 = vpop.f32.mrb[0].mxu0
    %v462 = vadd.f32 %v338, %v461
    %v463 = vpop.f32.mrb[0].mxu0
    %464 = vmatprep.mubr.f32.mxu0 %v294
    %465 = vmatmul.mubr.f32.gmra.mrb[0].mxu0 %v293
    %v466 = vpop.f32.mrb[0].mxu0
    %v467 = vadd.f32 %v338, %v466
    %v468 = vpop.f32.mrb[0].mxu0
    %469 = vmatprep.mubr.f32.mxu0 %v296
    %470 = vmatmul.mubr.f32.gmra.mrb[0].mxu0 %v295
    %v471 = vpop.f32.mrb[0].mxu0
    %v472 = vadd.f32 %v338, %v471
    %v473 = vpop.f32.mrb[0].mxu0
    %474 = vmatprep.mubr.f32.mxu0 %v298
    %475 = vmatmul.mubr.f32.gmra.mrb[0].mxu0 %v297
    %v476 = vpop.f32.mrb[0].mxu0
    %v477 = vadd.f32 %v338, %v476
    %v478 = vpop.f32.mrb[0].mxu0
    %479 = vmatprep.mubr.f32.mxu0 %v300
    %480 = vmatmul.mubr.f32.gmra.mrb[0].mxu0 %v299
    %v481 = vpop.f32.mrb[0].mxu0
    %v482 = vadd.f32 %v338, %v481
    %v483 = vpop.f32.mrb[0].mxu0
    %484 = vdwg.mxu0
    %vm485 = vcmask 31744
    %486 = vst.msk [vmem:[#allocation2] sm:$0xff] %vm485, %v407
    %487 = vst.msk [vmem:[#allocation2 + $0x8] sm:$0xff] %vm485, %v412
    %488 = vst.msk [vmem:[#allocation2 + $0x10] sm:$0xff] %vm485, %v417
    %489 = vst.msk [vmem:[#allocation2 + $0x18] sm:$0xff] %vm485, %v422
    %490 = vst.msk [vmem:[#allocation2 + $0x20] sm:$0xff] %vm485, %v427
    %491 = vst.msk [vmem:[#allocation2 + $0x28] sm:$0xff] %vm485, %v432
    %492 = vst.msk [vmem:[#allocation2 + $0x30] sm:$0xff] %vm485, %v437
    %493 = vst.msk [vmem:[#allocation2 + $0x38] sm:$0xff] %vm485, %v442
    %494 = vst.msk [vmem:[#allocation2 + $0x40] sm:$0xff] %vm485, %v447
    %495 = vst.msk [vmem:[#allocation2 + $0x48] sm:$0xff] %vm485, %v452
    %496 = vst.msk [vmem:[#allocation2 + $0x50] sm:$0xff] %vm485, %v457
    %497 = vst.msk [vmem:[#allocation2 + $0x58] sm:$0xff] %vm485, %v462
    %498 = vst.msk [vmem:[#allocation2 + $0x60] sm:$0xff] %vm485, %v467
    %499 = vst.msk [vmem:[#allocation2 + $0x68] sm:$0xff] %vm485, %v472
    %500 = vst.msk [vmem:[#allocation2 + $0x70] sm:$0xff] %vm485, %v477
    %501 = vst.msk [vmem:[#allocation2 + $0x78] sm:$0xff] %vm485, %v482
    // Predicated region
    $region22: #{snakenet_forward.1} parent=1 // pred_check
      _
    $region23: #{snakenet_forward.1} parent=1 // pred_check_branch
      %503 = sbr.rel (0) target = $region25
    $region24: #{snakenet_forward.1} parent=1 // pred_region
      // Predicated region
      $region26: #{snakenet_forward.1} parent=24 // pred_check
        _
      $region27: #{snakenet_forward.1} parent=24 // pred_check_branch
        %505 = sbr.rel (0) target = $region29
      $region28: #{snakenet_forward.1} parent=24 // pred_region
        // Predicated region
        $region30: #{snakenet_forward.1} parent=28 // pred_check
          _
        $region31: #{snakenet_forward.1} parent=28 // pred_check_branch
          %507 = sbr.rel (0) target = $region33
        $region32: #{snakenet_forward.1} parent=28 // pred_region
          // Predicated region
          $region45: #{snakenet_forward.1} parent=32 // pred_check
            _
          $region46: #{snakenet_forward.1} parent=32 // pred_check_branch
            %522 = sbr.rel (0) target = $region48
          $region47: #{snakenet_forward.1} parent=32 // pred_region
            loop: start=0, step=1, limit=1
            $region49: #{snakenet_forward.1} parent=47 // loop_pre_header
              _
            $region50: #{snakenet_forward.1} parent=47 // loop_header
              %s524 = sphi 0, %s528
              %p525 = scmp.ge.s32.totalorder %s524, 1
              %s529 = sphi [#allocation2], [#allocation2]
              %s530 = sphi %s5, %s5
            $region51: #{snakenet_forward.1} parent=47 // loop_header_branch
              %527 = sbr.rel (%p525) target = $region55
            $region52: #{snakenet_forward.1} parent=47 // loop_body
              %v531 = vld [vmem:[%s529] sm:$0xff]
              %532 = vst [vmem:[%s530] sm:$0xff] %v531
            $region53: #{snakenet_forward.1} parent=47 // loop_footer
              %s528 = sadd.s32 1, %s524
            $region54: #{snakenet_forward.1} parent=47 // loop_footer_branch
              %523 = sbr.rel target = $region50
            $region55: #{snakenet_forward.1} parent=47 // loop_exit
              _
          $region48: #{snakenet_forward.1} parent=32 // pred_fallthru
            _
          // Predicated region
          $region56: #{snakenet_forward.1} parent=32 // pred_check
            _
          $region57: #{snakenet_forward.1} parent=32 // pred_check_branch
            %534 = sbr.rel target = $region59
          $region58: #{snakenet_forward.1} parent=32 // pred_region
            _
          $region59: #{snakenet_forward.1} parent=32 // pred_fallthru
            _
        $region33: #{snakenet_forward.1} parent=28 // pred_fallthru
          _
        // Predicated region
        $region34: #{snakenet_forward.1} parent=28 // pred_check
          _
        $region35: #{snakenet_forward.1} parent=28 // pred_check_branch
          %509 = sbr.rel target = $region37
        $region36: #{snakenet_forward.1} parent=28 // pred_region
          loop: start=0, step=1, limit=1
          $region38: #{snakenet_forward.1} parent=36 // loop_pre_header
            _
          $region39: #{snakenet_forward.1} parent=36 // loop_header
            %s512 = sphi 0, %s516
            %p513 = scmp.ge.s32.totalorder %s512, 1
            %s517 = sphi [#allocation2], [#allocation2]
            %s518 = sphi %s5, %s5
          $region40: #{snakenet_forward.1} parent=36 // loop_header_branch
            %515 = sbr.rel (%p513) target = $region44
          $region41: #{snakenet_forward.1} parent=36 // loop_body
            %v519 = vld [vmem:[%s517] sm:$0xff]
            %520 = vst [vmem:[%s518] sm:$0xff] %v519
          $region42: #{snakenet_forward.1} parent=36 // loop_footer
            %s516 = sadd.s32 1, %s512
          $region43: #{snakenet_forward.1} parent=36 // loop_footer_branch
            %511 = sbr.rel target = $region39
          $region44: #{snakenet_forward.1} parent=36 // loop_exit
            _
        $region37: #{snakenet_forward.1} parent=28 // pred_fallthru
          _
      $region29: #{snakenet_forward.1} parent=24 // pred_fallthru
        _
      %535 = vnop
    $region25: #{snakenet_forward.1} parent=1 // pred_fallthru
      _
    // Predicated region
    $region60: #{snakenet_forward.1} parent=1 // pred_check
      _
    $region61: #{snakenet_forward.1} parent=1 // pred_check_branch
      %537 = sbr.rel (0) target = $region63
    $region62: #{snakenet_forward.1} parent=1 // pred_region
      _
    $region63: #{snakenet_forward.1} parent=1 // pred_fallthru
      _

</llo_original>
